<compile_context>
chip_gen: v7x
topology: tpu7x:2x2x1
jax: 0.10.0
libtpu: 0.0.40
codegen_flags: <defaults>
</compile_context>

<pallas_src>
import functools

import jax
import jax.numpy as jnp
from jax import lax
from jax.experimental import pallas as pl
from jax.experimental.pallas import tpu as pltpu


def _silu(v):
    return v * jax.nn.sigmoid(v)


def _round_up(x, m):
    return (x + m - 1) // m * m


def _mlp_ln_act_kernel(x_ref, cond_ref, w_lin_ref, w_emb_ref, pvec_ref, o_ref,
                       *, condition_bias, eps, out_real):
    # Two MXU pushes (bf16 operands, f32 accumulation). No scratch staging.
    h = jnp.dot(x_ref[...], w_lin_ref[...], preferred_element_type=jnp.float32)
    a = _silu(cond_ref[...].astype(jnp.float32)).astype(cond_ref.dtype)
    c = jnp.dot(a, w_emb_ref[...], preferred_element_type=jnp.float32)

    h = h + pvec_ref[0:1, :]                      # b_lin  (padded cols are 0)
    c = c + pvec_ref[1:2, :]                      # b_emb  (padded cols are 0)
    h = h * (condition_bias + c)                  # padded cols of h stay exactly 0

    # LayerNorm over the real out_channels (torch biased-variance semantics).
    # Padded columns contribute exactly 0 to both sums, so no masking is needed.
    inv_n = 1.0 / out_real
    mean = jnp.sum(h, axis=-1, keepdims=True) * inv_n
    var = jnp.sum(h * h, axis=-1, keepdims=True) * inv_n - mean * mean
    var = jnp.maximum(var, 0.0)                   # guard f32 cancellation
    h = (h - mean) * lax.rsqrt(var + eps)
    h = h * pvec_ref[2:3, :] + pvec_ref[3:4, :]   # gamma / beta (padded cols -> 0)

    # Final activation; dropout(p=0) is Identity.
    o_ref[...] = _silu(h).astype(o_ref.dtype)


def pack_params(params, *, compute_dtype=jnp.bfloat16):
    """One-time parameter packing: pad to lane-dense (x128) widths and cast the
    MXU operands to the compute dtype. Hoisted out of the per-call path."""
    IN, OUT = params["w_lin"].shape
    CC = params["w_emb"].shape[0]
    IN_p = _round_up(IN, 128)
    CC_p = _round_up(CC, 128)
    OUT_p = _round_up(OUT, 128)

    w_lin = jnp.zeros((IN_p, OUT_p), compute_dtype)
    w_lin = w_lin.at[:IN, :OUT].set(params["w_lin"].astype(compute_dtype))
    w_emb = jnp.zeros((CC_p, OUT_p), compute_dtype)
    w_emb = w_emb.at[:CC, :OUT].set(params["w_emb"].astype(compute_dtype))

    # Rows: [b_lin; b_emb; gamma; beta], f32, padded columns stay zero.
    pvec = jnp.zeros((4, OUT_p), jnp.float32)
    pvec = pvec.at[0, :OUT].set(params["b_lin"].reshape(-1).astype(jnp.float32))
    pvec = pvec.at[1, :OUT].set(params["b_emb"].reshape(-1).astype(jnp.float32))
    pvec = pvec.at[2, :OUT].set(params["gamma"].reshape(-1).astype(jnp.float32))
    pvec = pvec.at[3, :OUT].set(params["beta"].reshape(-1).astype(jnp.float32))

    return dict(w_lin=w_lin, w_emb=w_emb, pvec=pvec,
                in_channels=IN, cond_channels=CC, out_channels=OUT)


def _vmem_cap_bytes():
    """Generation-aware VMEM cap with headroom (64 MiB/TC on v7x, 128 MiB on
    v5e/v6e); conservative fallback if the query is unavailable."""
    try:
        cap = int(pltpu.get_tpu_info().vmem_capacity_bytes)
    except Exception:
        cap = 64 << 20
    return max(cap - (16 << 20), 16 << 20)


def mlp_ln_act(x, cond, packed, *, condition_bias=1.0, eps=1e-5, tile_b=512,
               compute_dtype=jnp.bfloat16):
    """Fused MLPLNAct forward. x: [B, IN], cond: [B, CC] -> [B, OUT]."""
    B, IN = x.shape
    CC = cond.shape[-1]
    assert cond.shape[0] == B
    assert IN == packed["in_channels"] and CC == packed["cond_channels"]
    OUT = packed["out_channels"]
    IN_p, OUT_p = packed["w_lin"].shape
    CC_p = packed["w_emb"].shape[0]
    out_dtype = x.dtype

    # Batch tiling: multiples of 16 (bf16 sublane packing). If the whole batch
    # fits in a single tile, split into >=2 grid steps so the 'parallel' axis
    # can be sharded across v7x's two TensorCores.
    tb = min(tile_b, _round_up(B, 16))
    if B > 16 and _round_up(B, tb) // tb < 2:
        tb = _round_up(pl.cdiv(B, 2), 16)
    B_p = _round_up(B, tb)

    # Pad / cast activations only when needed (avoid extra HBM passes).
    xp = x if x.dtype == compute_dtype else x.astype(compute_dtype)
    if (B_p, IN_p) != (B, IN):
        xp = jnp.pad(xp, ((0, B_p - B), (0, IN_p - IN)))
    cp = cond if cond.dtype == compute_dtype else cond.astype(compute_dtype)
    if (B_p, CC_p) != (B, CC):
        cp = jnp.pad(cp, ((0, B_p - B), (0, CC_p - CC)))

    # VMEM budget: double-buffered activation tiles + weights/params (the
    # pipeline allocates 2 buffers even for constant-index operands) + slack.
    # TODO(synk): single-buffer the constant weight operands (pl.Buffered(1) or
    # a manual DMA) and add a K grid axis ('arbitrary' + f32 accumulator) for
    # very wide layers whose split weights approach the v7x 64 MiB budget.
    bpe = jnp.dtype(compute_dtype).itemsize
    need = (2 * tb * (IN_p + CC_p) * bpe
            + 2 * tb * OUT_p * jnp.dtype(out_dtype).itemsize
            + 2 * (IN_p + CC_p) * OUT_p * bpe
            + 2 * 4 * OUT_p * 4)
    vmem_limit = int(min(max(need + (4 << 20), 16 << 20), _vmem_cap_bytes()))

    kernel = functools.partial(
        _mlp_ln_act_kernel,
        condition_bias=float(condition_bias), eps=float(eps), out_real=OUT)

    const = lambda i: (0, 0)
    out = pl.pallas_call(
        kernel,
        out_shape=jax.ShapeDtypeStruct((B_p, OUT_p), out_dtype),
        grid=(B_p // tb,),
        in_specs=[
            pl.BlockSpec((tb, IN_p), lambda i: (i, 0)),   # x tile
            pl.BlockSpec((tb, CC_p), lambda i: (i, 0)),   # cond tile
            pl.BlockSpec((IN_p, OUT_p), const),           # W_lin (resident)
            pl.BlockSpec((CC_p, OUT_p), const),           # W_emb (resident)
            pl.BlockSpec((4, OUT_p), const),              # [b_lin;b_emb;gamma;beta]
        ],
        out_specs=pl.BlockSpec((tb, OUT_p), lambda i: (i, 0)),
        compiler_params=pltpu.CompilerParams(
            dimension_semantics=("parallel",),
            vmem_limit_bytes=vmem_limit),
    )(xp, cp, packed["w_lin"], packed["w_emb"], packed["pvec"])

    if (B_p, OUT_p) != (B, OUT):
        out = out[:B, :OUT]
    return out


def init_params(key, in_channels, out_channels, cond_channels):
    """Parameter init mirroring MLPLNAct.init_weights (kaiming_normal, relu
    gain for 'silu'); Linear biases use PyTorch's default uniform init."""
    k1, k2, k3, k4 = jax.random.split(key, 4)
    gain = jnp.sqrt(2.0)
    w_lin = (gain / jnp.sqrt(in_channels)) * jax.random.normal(
        k1, (in_channels, out_channels), jnp.float32)
    w_emb = (gain / jnp.sqrt(cond_channels)) * jax.random.normal(
        k2, (cond_channels, out_channels), jnp.float32)
    b_lin = jax.random.uniform(k3, (1, out_channels), jnp.float32,
                               -1.0 / jnp.sqrt(in_channels),
                               1.0 / jnp.sqrt(in_channels))
    b_emb = jax.random.uniform(k4, (1, out_channels), jnp.float32,
                               -1.0 / jnp.sqrt(cond_channels),
                               1.0 / jnp.sqrt(cond_channels))
    gamma = jnp.ones((1, out_channels), jnp.float32)
    beta = jnp.zeros((1, out_channels), jnp.float32)
    return dict(w_lin=w_lin, b_lin=b_lin, w_emb=w_emb, b_emb=b_emb,
                gamma=gamma, beta=beta)


def mlp_ln_act_ref(x, cond, p, *, condition_bias=1.0, eps=1e-5,
                   compute_dtype=jnp.float32):
    """Plain-JAX reference; compute_dtype controls matmul operand precision."""
    xb = x.astype(compute_dtype)
    h = jnp.dot(xb, p["w_lin"].astype(compute_dtype),
                preferred_element_type=jnp.float32) + p["b_lin"]
    a = _silu(cond.astype(compute_dtype).astype(jnp.float32)).astype(compute_dtype)
    c = jnp.dot(a, p["w_emb"].astype(compute_dtype),
                preferred_element_type=jnp.float32) + p["b_emb"]
    h = h * (condition_bias + c)
    mean = jnp.mean(h, axis=-1, keepdims=True)
    cen = h - mean
    var = jnp.mean(cen * cen, axis=-1, keepdims=True)
    h = cen * lax.rsqrt(var + eps)
    h = h * p["gamma"] + p["beta"]
    return _silu(h)


if __name__ == "__main__":
    B, IN, OUT, CC = 16, 32, 32, 16
    key = jax.random.PRNGKey(0)
    kx, kc, kp = jax.random.split(key, 3)
    x = jax.random.normal(kx, (B, IN), jnp.float32)
    cond = jax.random.normal(kc, (B, CC), jnp.float32)
    params = init_params(kp, IN, OUT, CC)
    packed = pack_params(params)          # one-time packing; cache across calls

    out = mlp_ln_act(x, cond, packed, condition_bias=1.0)
    out = jax.block_until_ready(out)
    assert out.shape == (B, OUT)

    # Precision-matched reference (bf16 operands, f32 accumulation) -> tight.
    ref_bf16 = mlp_ln_act_ref(x, cond, params, condition_bias=1.0,
                              compute_dtype=jnp.bfloat16)
    assert jnp.allclose(out, ref_bf16, atol=2e-3, rtol=2e-3), \
        float(jnp.max(jnp.abs(out - ref_bf16)))

    # Full-f32 reference -> loose sanity bound for the bf16 operand rounding.
    ref_f32 = mlp_ln_act_ref(x, cond, params, condition_bias=1.0)
    assert jnp.allclose(out, ref_f32, atol=1e-1, rtol=1e-1), \
        float(jnp.max(jnp.abs(out - ref_f32)))

    print("KERNEL_OK")
</pallas_src>

<mosaic_0001>
module attributes {stable_mosaic.version = 11 : i64} {
  func.func @_mlp_ln_act_kernel(%arg0: i32, %arg1: memref<16x128xbf16, #tpu.memory_space<vmem>>, %arg2: memref<16x128xbf16, #tpu.memory_space<vmem>>, %arg3: memref<128x128xbf16, #tpu.memory_space<vmem>>, %arg4: memref<128x128xbf16, #tpu.memory_space<vmem>>, %arg5: memref<4x128xf32, #tpu.memory_space<vmem>>, %arg6: memref<16x128xf32, #tpu.memory_space<vmem>>) attributes {dimension_semantics = [#tpu.dimension_semantics<parallel>], iteration_bounds = array<i64: 1>, scalar_prefetch = 0 : i64, scratch_operands = 0 : i64, tpu.core_type = #tpu.core_type<tc>, window_params = [{transform_indices = @transform_0, window_bounds = array<i64: 16, 128>}, {transform_indices = @transform_1, window_bounds = array<i64: 16, 128>}, {pipeline_mode = #tpu.pipeline_mode<synchronous>, transform_indices = @transform_2, window_bounds = array<i64: 128, 128>}, {pipeline_mode = #tpu.pipeline_mode<synchronous>, transform_indices = @transform_3, window_bounds = array<i64: 128, 128>}, {pipeline_mode = #tpu.pipeline_mode<synchronous>, transform_indices = @transform_4, window_bounds = array<i64: 4, 128>}, {transform_indices = @transform_5, window_bounds = array<i64: 16, 128>}]} {
    %c0 = arith.constant 0 : index
    %c0_0 = arith.constant 0 : index
    %0 = vector.load %arg1[%c0, %c0_0] : memref<16x128xbf16, #tpu.memory_space<vmem>>, vector<16x128xbf16>
    %c0_1 = arith.constant 0 : index
    %c0_2 = arith.constant 0 : index
    %1 = vector.load %arg3[%c0_1, %c0_2] : memref<128x128xbf16, #tpu.memory_space<vmem>>, vector<128x128xbf16>
    %cst = arith.constant dense<0.000000e+00> : vector<16x128xf32>
    %2 = tpu.matmul %0, %1, %cst {dimension_numbers = #tpu.dot_dimension_numbers<[1], [0], [0], [1], [0, 0, 1, 1], [], []>} : vector<16x128xbf16>, vector<128x128xbf16>, vector<16x128xf32> -> vector<16x128xf32>
    %c0_3 = arith.constant 0 : index
    %c0_4 = arith.constant 0 : index
    %3 = vector.load %arg2[%c0_3, %c0_4] : memref<16x128xbf16, #tpu.memory_space<vmem>>, vector<16x128xbf16>
    %4 = arith.extf %3 : vector<16x128xbf16> to vector<16x128xf32>
    %5 = arith.negf %4 : vector<16x128xf32>
    %6 = math.exp %5 : vector<16x128xf32>
    %cst_5 = arith.constant 1.000000e+00 : f32
    %7 = vector.broadcast %cst_5 : f32 to vector<16x128xf32>
    %8 = arith.addf %7, %6 : vector<16x128xf32>
    %9 = arith.divf %7, %8 : vector<16x128xf32>
    %10 = arith.mulf %4, %9 : vector<16x128xf32>
    %11 = arith.truncf %10 : vector<16x128xf32> to vector<16x128xbf16>
    %c0_6 = arith.constant 0 : index
    %c0_7 = arith.constant 0 : index
    %12 = vector.load %arg4[%c0_6, %c0_7] : memref<128x128xbf16, #tpu.memory_space<vmem>>, vector<128x128xbf16>
    %cst_8 = arith.constant dense<0.000000e+00> : vector<16x128xf32>
    %13 = tpu.matmul %11, %12, %cst_8 {dimension_numbers = #tpu.dot_dimension_numbers<[1], [0], [0], [1], [0, 0, 1, 1], [], []>} : vector<16x128xbf16>, vector<128x128xbf16>, vector<16x128xf32> -> vector<16x128xf32>
    %c0_9 = arith.constant 0 : index
    %c0_10 = arith.constant 0 : index
    %14 = vector.load %arg5[%c0_9, %c0_10] : memref<4x128xf32, #tpu.memory_space<vmem>>, vector<1x128xf32>
    %15 = vector.broadcast %14 : vector<1x128xf32> to vector<16x128xf32>
    %16 = arith.addf %2, %15 : vector<16x128xf32>
    %c1 = arith.constant 1 : index
    %c0_11 = arith.constant 0 : index
    %17 = vector.load %arg5[%c1, %c0_11] : memref<4x128xf32, #tpu.memory_space<vmem>>, vector<1x128xf32>
    %18 = vector.broadcast %17 : vector<1x128xf32> to vector<16x128xf32>
    %19 = arith.addf %13, %18 : vector<16x128xf32>
    %cst_12 = arith.constant 1.000000e+00 : f32
    %20 = vector.broadcast %cst_12 : f32 to vector<16x128xf32>
    %21 = arith.addf %20, %19 : vector<16x128xf32>
    %22 = arith.mulf %16, %21 : vector<16x128xf32>
    %cst_13 = arith.constant dense<0.000000e+00> : vector<16xf32>
    %23 = vector.multi_reduction <add>, %22, %cst_13 [1] : vector<16x128xf32> to vector<16xf32>
    %24 = vector.shape_cast %23 : vector<16xf32> to vector<16x1xf32>
    %cst_14 = arith.constant 3.125000e-02 : f32
    %25 = vector.broadcast %cst_14 : f32 to vector<16x1xf32>
    %26 = arith.mulf %24, %25 : vector<16x1xf32>
    %27 = arith.mulf %22, %22 : vector<16x128xf32>
    %cst_15 = arith.constant dense<0.000000e+00> : vector<16xf32>
    %28 = vector.multi_reduction <add>, %27, %cst_15 [1] : vector<16x128xf32> to vector<16xf32>
    %29 = vector.shape_cast %28 : vector<16xf32> to vector<16x1xf32>
    %cst_16 = arith.constant 3.125000e-02 : f32
    %30 = vector.broadcast %cst_16 : f32 to vector<16x1xf32>
    %31 = arith.mulf %29, %30 : vector<16x1xf32>
    %32 = arith.mulf %26, %26 : vector<16x1xf32>
    %33 = arith.subf %31, %32 : vector<16x1xf32>
    %cst_17 = arith.constant 0.000000e+00 : f32
    %34 = vector.broadcast %cst_17 : f32 to vector<16x1xf32>
    %35 = arith.maximumf %33, %34 : vector<16x1xf32>
    %36 = vector.broadcast %26 : vector<16x1xf32> to vector<16x128xf32>
    %37 = arith.subf %22, %36 : vector<16x128xf32>
    %cst_18 = arith.constant 9.99999974E-6 : f32
    %38 = vector.broadcast %cst_18 : f32 to vector<16x1xf32>
    %39 = arith.addf %35, %38 : vector<16x1xf32>
    %40 = math.rsqrt %39 : vector<16x1xf32>
    %41 = vector.broadcast %40 : vector<16x1xf32> to vector<16x128xf32>
    %42 = arith.mulf %37, %41 : vector<16x128xf32>
    %c2 = arith.constant 2 : index
    %c0_19 = arith.constant 0 : index
    %43 = vector.load %arg5[%c2, %c0_19] : memref<4x128xf32, #tpu.memory_space<vmem>>, vector<1x128xf32>
    %44 = vector.broadcast %43 : vector<1x128xf32> to vector<16x128xf32>
    %45 = arith.mulf %42, %44 : vector<16x128xf32>
    %c3 = arith.constant 3 : index
    %c0_20 = arith.constant 0 : index
    %46 = vector.load %arg5[%c3, %c0_20] : memref<4x128xf32, #tpu.memory_space<vmem>>, vector<1x128xf32>
    %47 = vector.broadcast %46 : vector<1x128xf32> to vector<16x128xf32>
    %48 = arith.addf %45, %47 : vector<16x128xf32>
    %49 = arith.negf %48 : vector<16x128xf32>
    %50 = math.exp %49 : vector<16x128xf32>
    %cst_21 = arith.constant 1.000000e+00 : f32
    %51 = vector.broadcast %cst_21 : f32 to vector<16x128xf32>
    %52 = arith.addf %51, %50 : vector<16x128xf32>
    %53 = arith.divf %51, %52 : vector<16x128xf32>
    %54 = arith.mulf %48, %53 : vector<16x128xf32>
    %c0_22 = arith.constant 0 : index
    %c0_23 = arith.constant 0 : index
    %55 = vector.load %arg6[%c0_22, %c0_23] : memref<16x128xf32, #tpu.memory_space<vmem>>, vector<16x128xf32>
    tpu.vector_store %arg6[%c0_22, %c0_23], %54 {strides = array<i32>} : memref<16x128xf32, #tpu.memory_space<vmem>>, vector<16x128xf32>,
    return
  }
  func.func @transform_0(%arg0: i32) -> (i32, i32) {
    %c0_i32 = arith.constant 0 : i32
    %c0_i32_0 = arith.constant 0 : i32
    return %arg0, %c0_i32 : i32, i32
  }
  func.func @transform_1(%arg0: i32) -> (i32, i32) {
    %c0_i32 = arith.constant 0 : i32
    %c0_i32_0 = arith.constant 0 : i32
    return %arg0, %c0_i32 : i32, i32
  }
  func.func @transform_2(%arg0: i32) -> (i32, i32) {
    %c0_i32 = arith.constant 0 : i32
    %c0_i32_0 = arith.constant 0 : i32
    %c0_i32_1 = arith.constant 0 : i32
    return %c0_i32, %c0_i32_0 : i32, i32
  }
  func.func @transform_3(%arg0: i32) -> (i32, i32) {
    %c0_i32 = arith.constant 0 : i32
    %c0_i32_0 = arith.constant 0 : i32
    %c0_i32_1 = arith.constant 0 : i32
    return %c0_i32, %c0_i32_0 : i32, i32
  }
  func.func @transform_4(%arg0: i32) -> (i32, i32) {
    %c0_i32 = arith.constant 0 : i32
    %c0_i32_0 = arith.constant 0 : i32
    %c0_i32_1 = arith.constant 0 : i32
    return %c0_i32, %c0_i32_0 : i32, i32
  }
  func.func @transform_5(%arg0: i32) -> (i32, i32) {
    %c0_i32 = arith.constant 0 : i32
    %c0_i32_0 = arith.constant 0 : i32
    return %arg0, %c0_i32 : i32, i32
  }
}

</mosaic_0001>

<llo_original>
// kernel: tpu_custom_call.1
$region0: #{tpu_custom_call.1}
  #allocation0 [shape = 'u32[]', space=smem, size = 0x4, offset = 0x4, fixed_abs, tag = 'smem constant byte address 0x4 - core index']
  #allocation1 [shape = 'u32[144,128]{1,0:T(1,128)}', space=vmem, size = 0x12000, scoped, tag = 'internal scratch']
  %s0 = inlined_call_operand.hbm [shape: bf16[16,128], index: 0, kind: input, shape index: {}]
  %s1 = inlined_call_operand.hbm [shape: bf16[16,128], index: 1, kind: input, shape index: {}]
  %s2 = inlined_call_operand.hbm [shape: bf16[128,128], index: 2, kind: input, shape index: {}]
  %s3 = inlined_call_operand.hbm [shape: bf16[128,128], index: 3, kind: input, shape index: {}]
  %s4 = inlined_call_operand.vmem [shape: f32[4,128], index: 4, kind: input, shape index: {}]
  %s5 = inlined_call_operand.hbm [shape: f32[16,128], index: 5, kind: output, shape index: {}]
  %s6 = sld [smem:[#allocation0]]
  $region46: #{tpu_custom_call.1} parent=0
    _
  %s8 = ssub.s32 1, %s6
  %s9 = scalar_select 0, %s8, %s6
  $region1: #{tpu_custom_call.1} parent=0
    #allocation2 [shape = 'u8[4096]{0}', space=vmem, size = 0x1000, scoped, tag = 'input window, operand 0, single buffered']
    #allocation3 [shape = 's32[1]{0}', space=sflag, size = 0x4, scoped, tag = 'scoped memory for tpu_custom_call.1']
    #allocation4 [shape = 's32[1]{0}', space=sflag, size = 0x4, scoped, tag = 'scoped memory for tpu_custom_call.1']
    #allocation5 [shape = 'u8[4096]{0}', space=vmem, size = 0x1000, scoped, tag = 'input window, operand 1, single buffered']
    #allocation6 [shape = 's32[1]{0}', space=sflag, size = 0x4, scoped, tag = 'scoped memory for tpu_custom_call.1']
    #allocation7 [shape = 'u8[32768]{0}', space=vmem, size = 0x8000, scoped, tag = 'input window, operand 2, single buffered']
    #allocation8 [shape = 'u8[32768]{0}', space=vmem, size = 0x8000, scoped, tag = 'input window, operand 3, single buffered']
    #allocation9 [shape = 's32[1]{0}', space=sflag, size = 0x4, scoped, tag = 'scoped memory for tpu_custom_call.1']
    #allocation10 [shape = 'u8[8192]{0}', space=vmem, size = 0x2000, scoped, tag = 'output window, operand 0, single buffered']
    %10 = vsyncpa [#allocation3], 0
    %11 = vsyncpa [#allocation6], 0
    %12 = vsyncpa [#allocation9], 0
    %13 = vsyncpa [#allocation4], 0
    // Predicated region
    $region2: #{tpu_custom_call.1} parent=1 // pred_check
      _
    $region3: #{tpu_custom_call.1} parent=1 // pred_check_branch
      %15 = sbr.rel (0) target = $region5
    $region4: #{tpu_custom_call.1} parent=1 // pred_region
      %s17 = ssub.s32 128, 128
      %18 = vsyncadd [#allocation3], %s17
      %s19 = sshll.u32 [#allocation2], 4
      %s20 = int_to_ptr.vmem [resolvable:$true] %s19
      %25 = dma.hbm_to_vmem [thread:$0]  %s0, 128, %s20, [#allocation3], 64, 64, 4
    $region5: #{tpu_custom_call.1} parent=1 // pred_fallthru
      _
    // Predicated region
    $region6: #{tpu_custom_call.1} parent=1 // pred_check
      _
    $region7: #{tpu_custom_call.1} parent=1 // pred_check_branch
      %27 = sbr.rel (0) target = $region9
    $region8: #{tpu_custom_call.1} parent=1 // pred_region
      %s29 = ssub.s32 128, 128
      %30 = vsyncadd [#allocation6], %s29
      %s31 = sshll.u32 [#allocation5], 4
      %s32 = int_to_ptr.vmem [resolvable:$true] %s31
      %37 = dma.hbm_to_vmem [thread:$0]  %s1, 128, %s32, [#allocation6], 64, 64, 4
    $region9: #{tpu_custom_call.1} parent=1 // pred_fallthru
      _
    // Predicated region
    $region10: #{tpu_custom_call.1} parent=1 // pred_check
      _
    $region11: #{tpu_custom_call.1} parent=1 // pred_check_branch
      %39 = sbr.rel (0) target = $region13
    $region12: #{tpu_custom_call.1} parent=1 // pred_region
      %s41 = ssub.s32 1024, 1024
      %42 = vsyncadd [#allocation6], %s41
      %s43 = sshll.u32 [#allocation7], 4
      %s44 = int_to_ptr.vmem [resolvable:$true] %s43
      %49 = dma.hbm_to_vmem [thread:$0]  %s2, 1024, %s44, [#allocation6], 64, 64, 4
    $region13: #{tpu_custom_call.1} parent=1 // pred_fallthru
      _
    // Predicated region
    $region14: #{tpu_custom_call.1} parent=1 // pred_check
      _
    $region15: #{tpu_custom_call.1} parent=1 // pred_check_branch
      %51 = sbr.rel (0) target = $region17
    $region16: #{tpu_custom_call.1} parent=1 // pred_region
      %s53 = ssub.s32 1024, 1024
      %54 = vsyncadd [#allocation9], %s53
      %s55 = sshll.u32 [#allocation8], 4
      %s56 = int_to_ptr.vmem [resolvable:$true] %s55
      %61 = dma.hbm_to_vmem [thread:$0]  %s3, 1024, %s56, [#allocation9], 64, 64, 4
    $region17: #{tpu_custom_call.1} parent=1 // pred_fallthru
      _
    // Predicated region
    $region18: #{tpu_custom_call.1} parent=1 // pred_check
      _
    $region19: #{tpu_custom_call.1} parent=1 // pred_check_branch
      %63 = sbr.rel (0) target = $region21
    $region20: #{tpu_custom_call.1} parent=1 // pred_region
      _
    $region21: #{tpu_custom_call.1} parent=1 // pred_fallthru
      _
    // Predicated region
    $region22: #{tpu_custom_call.1} parent=1 // pred_check
      _
    $region23: #{tpu_custom_call.1} parent=1 // pred_check_branch
      %65 = sbr.rel (0) target = $region25
    $region24: #{tpu_custom_call.1} parent=1 // pred_region
      %66 = dma.done [#allocation3], 128
    $region25: #{tpu_custom_call.1} parent=1 // pred_fallthru
      _
    // Predicated region
    $region26: #{tpu_custom_call.1} parent=1 // pred_check
      _
    $region27: #{tpu_custom_call.1} parent=1 // pred_check_branch
      %68 = sbr.rel (0) target = $region29
    $region28: #{tpu_custom_call.1} parent=1 // pred_region
      %69 = dma.done [#allocation6], 128
    $region29: #{tpu_custom_call.1} parent=1 // pred_fallthru
      _
    // Predicated region
    $region30: #{tpu_custom_call.1} parent=1 // pred_check
      _
    $region31: #{tpu_custom_call.1} parent=1 // pred_check_branch
      %71 = sbr.rel (0) target = $region33
    $region32: #{tpu_custom_call.1} parent=1 // pred_region
      %72 = dma.done [#allocation6], 1024
    $region33: #{tpu_custom_call.1} parent=1 // pred_fallthru
      _
    // Predicated region
    $region34: #{tpu_custom_call.1} parent=1 // pred_check
      _
    $region35: #{tpu_custom_call.1} parent=1 // pred_check_branch
      %74 = sbr.rel (0) target = $region37
    $region36: #{tpu_custom_call.1} parent=1 // pred_region
      %75 = dma.done [#allocation9], 1024
    $region37: #{tpu_custom_call.1} parent=1 // pred_fallthru
      _
    %v77 = vld [vmem:[#allocation2] sm:$0xf]
    %v78 = vld [vmem:[#allocation2 + $0x4] sm:$0xf]
    %v79 = vld [vmem:[#allocation7] sm:$0xf]
    %v80 = vld [vmem:[#allocation7 + $0x4] sm:$0xf]
    %v81 = vld [vmem:[#allocation7 + $0x8] sm:$0xf]
    %v82 = vld [vmem:[#allocation7 + $0xc] sm:$0xf]
    %v83 = vld [vmem:[#allocation7 + $0x10] sm:$0xf]
    %v84 = vld [vmem:[#allocation7 + $0x14] sm:$0xf]
    %v85 = vld [vmem:[#allocation7 + $0x18] sm:$0xf]
    %v86 = vld [vmem:[#allocation7 + $0x1c] sm:$0xf]
    %v87 = vld [vmem:[#allocation7 + $0x20] sm:$0xf]
    %v88 = vld [vmem:[#allocation7 + $0x24] sm:$0xf]
    %v89 = vld [vmem:[#allocation7 + $0x28] sm:$0xf]
    %v90 = vld [vmem:[#allocation7 + $0x2c] sm:$0xf]
    %v91 = vld [vmem:[#allocation7 + $0x30] sm:$0xf]
    %v92 = vld [vmem:[#allocation7 + $0x34] sm:$0xf]
    %v93 = vld [vmem:[#allocation7 + $0x38] sm:$0xf]
    %v94 = vld [vmem:[#allocation7 + $0x3c] sm:$0xf]
    %v95 = vld [vmem:[#allocation5] sm:$0xf]
    %v96 = vld [vmem:[#allocation5 + $0x4] sm:$0xf]
    %v97 = vunpack.c.l.bf16 %v95
    %v98 = vunpack.c.l.bf16 %v96
    %v99 = vxor.u32 %v97, 2147483648
    %v100 = vxor.u32 %v98, 2147483648
    %v101 = vmul.f32 %v99, 1.442695
    %v102 = vpow.pop %v101
    %v103 = vmul.f32 %v100, 1.442695
    %v104 = vpow.pop %v103
    %v105 = vadd.f32 %v102, 1.0
    %v106 = vadd.f32 %v104, 1.0
    %v107 = vrcp.pop %v105
    %v108 = vmul.f32 1.0, %v107
    %v109 = vrcp.pop %v106
    %v110 = vmul.f32 1.0, %v109
    %v111 = vmul.f32 %v97, %v108
    %v112 = vmul.f32 %v98, %v110
    %v113 = vpack.c.bf16 %v112, %v111
    %v114 = vld [vmem:[#allocation8] sm:$0xf]
    %v115 = vld [vmem:[#allocation8 + $0x4] sm:$0xf]
    %v116 = vld [vmem:[#allocation8 + $0x8] sm:$0xf]
    %v117 = vld [vmem:[#allocation8 + $0xc] sm:$0xf]
    %v118 = vld [vmem:[#allocation8 + $0x10] sm:$0xf]
    %v119 = vld [vmem:[#allocation8 + $0x14] sm:$0xf]
    %v120 = vld [vmem:[#allocation8 + $0x18] sm:$0xf]
    %v121 = vld [vmem:[#allocation8 + $0x1c] sm:$0xf]
    %v122 = vld [vmem:[#allocation8 + $0x20] sm:$0xf]
    %v123 = vld [vmem:[#allocation8 + $0x24] sm:$0xf]
    %v124 = vld [vmem:[#allocation8 + $0x28] sm:$0xf]
    %v125 = vld [vmem:[#allocation8 + $0x2c] sm:$0xf]
    %v126 = vld [vmem:[#allocation8 + $0x30] sm:$0xf]
    %v127 = vld [vmem:[#allocation8 + $0x34] sm:$0xf]
    %v128 = vld [vmem:[#allocation8 + $0x38] sm:$0xf]
    %v129 = vld [vmem:[#allocation8 + $0x3c] sm:$0xf]
    %v130 = vld [vmem:[%s4] sm:$0x1]
    %v131 = vlaneseq
    %v132 = vshrl.u32 %v131, 7
    %v133 = vsub.s32 0, %v132
    %v134 = vrot.slane %v130, %v133
    %v137 = vunpack.c.l.b16 %v77
    %v138 = vunpack.c.l.b16 %v78
    %v139 = vpack.c.b16 %v138, %v137
    %v157 = vunpack.c.l.b16 %v79
    %v158 = vunpack.c.l.b16 %v80
    %v159 = vunpack.c.l.b16 %v81
    %v160 = vunpack.c.l.b16 %v82
    %v161 = vunpack.c.l.b16 %v83
    %v162 = vunpack.c.l.b16 %v84
    %v163 = vunpack.c.l.b16 %v85
    %v164 = vunpack.c.l.b16 %v86
    %v165 = vunpack.c.l.b16 %v87
    %v166 = vunpack.c.l.b16 %v88
    %v167 = vunpack.c.l.b16 %v89
    %v168 = vunpack.c.l.b16 %v90
    %v169 = vunpack.c.l.b16 %v91
    %v170 = vunpack.c.l.b16 %v92
    %v171 = vunpack.c.l.b16 %v93
    %v172 = vunpack.c.l.b16 %v94
    %v173 = vpack.c.b16 %v158, %v157
    %v174 = vpack.c.b16 %v160, %v159
    %v175 = vpack.c.b16 %v162, %v161
    %v176 = vpack.c.b16 %v164, %v163
    %v177 = vpack.c.b16 %v166, %v165
    %v178 = vpack.c.b16 %v168, %v167
    %v179 = vpack.c.b16 %v170, %v169
    %v180 = vpack.c.b16 %v172, %v171
    %189 = vmatprep.subr.bf16.mxu0 0
    %190 = vmatpush1.bf16.msra.mxu0 %v173
    %191 = vmatprep.subr.bf16.mxu0 0
    %192 = vmatpush1.bf16.msra.mxu0 %v174
    %193 = vmatprep.subr.bf16.mxu0 0
    %194 = vmatpush1.bf16.msra.mxu0 %v175
    %195 = vmatprep.subr.bf16.mxu0 0
    %196 = vmatpush1.bf16.msra.mxu0 %v176
    %197 = vmatprep.subr.bf16.mxu0 0
    %198 = vmatpush1.bf16.msra.mxu0 %v177
    %199 = vmatprep.subr.bf16.mxu0 0
    %200 = vmatpush1.bf16.msra.mxu0 %v178
    %201 = vmatprep.subr.bf16.mxu0 0
    %202 = vmatpush1.bf16.msra.mxu0 %v179
    %203 = vmatprep.subr.bf16.mxu0 0
    %204 = vmatpush1.bf16.msra.mxu0 %v180
    %205 = vmatprep.subr.bf16.mxu0 0
    %206 = vmatpush1.bf16.msra.mxu0 0
    %207 = vmatprep.subr.bf16.mxu0 0
    %208 = vmatpush1.bf16.msra.mxu0 0
    %209 = vmatprep.subr.bf16.mxu0 0
    %210 = vmatpush1.bf16.msra.mxu0 0
    %211 = vmatprep.subr.bf16.mxu0 0
    %212 = vmatpush1.bf16.msra.mxu0 0
    %213 = vmatprep.subr.bf16.mxu0 0
    %214 = vmatpush1.bf16.msra.mxu0 0
    %215 = vmatprep.subr.bf16.mxu0 0
    %216 = vmatpush1.bf16.msra.mxu0 0
    %217 = vmatprep.subr.bf16.mxu0 0
    %218 = vmatpush1.bf16.msra.mxu0 0
    %219 = vmatprep.subr.bf16.mxu0 0
    %220 = vmatpush1.bf16.msra.mxu0 0
    %221 = vmatprep.mubr.bf16.mxu0 0
    %222 = vmatmul.mubr.bf16.gmra.mrb[0].mxu0 %v139
    %v223 = vpop.f32.mrb[0].mxu0
    %v224 = vadd.f32 %v134, %v223
    %v225 = vpop.f32.mrb[0].mxu0
    %v226 = vpop.f32.mrb[0].mxu0
    %v227 = vadd.f32 %v134, %v226
    %v228 = vpop.f32.mrb[0].mxu0
    %229 = vdwg.mxu0
    %v230 = vld [vmem:[%s4 + $0x1] sm:$0x1]
    %v231 = vlaneseq
    %v232 = vshrl.u32 %v231, 7
    %v233 = vsub.s32 0, %v232
    %v234 = vrot.slane %v230, %v233
    %v251 = vunpack.c.l.b16 %v114
    %v252 = vunpack.c.l.b16 %v115
    %v253 = vunpack.c.l.b16 %v116
    %v254 = vunpack.c.l.b16 %v117
    %v255 = vunpack.c.l.b16 %v118
    %v256 = vunpack.c.l.b16 %v119
    %v257 = vunpack.c.l.b16 %v120
    %v258 = vunpack.c.l.b16 %v121
    %v259 = vunpack.c.l.b16 %v122
    %v260 = vunpack.c.l.b16 %v123
    %v261 = vunpack.c.l.b16 %v124
    %v262 = vunpack.c.l.b16 %v125
    %v263 = vunpack.c.l.b16 %v126
    %v264 = vunpack.c.l.b16 %v127
    %v265 = vunpack.c.l.b16 %v128
    %v266 = vunpack.c.l.b16 %v129
    %v267 = vpack.c.b16 %v252, %v251
    %v268 = vpack.c.b16 %v254, %v253
    %v269 = vpack.c.b16 %v256, %v255
    %v270 = vpack.c.b16 %v258, %v257
    %v271 = vpack.c.b16 %v260, %v259
    %v272 = vpack.c.b16 %v262, %v261
    %v273 = vpack.c.b16 %v264, %v263
    %v274 = vpack.c.b16 %v266, %v265
    %283 = vmatprep.subr.bf16.mxu0 0
    %284 = vmatpush1.bf16.msra.mxu0 %v267
    %285 = vmatprep.subr.bf16.mxu0 0
    %286 = vmatpush1.bf16.msra.mxu0 %v268
    %287 = vmatprep.subr.bf16.mxu0 0
    %288 = vmatpush1.bf16.msra.mxu0 %v269
    %289 = vmatprep.subr.bf16.mxu0 0
    %290 = vmatpush1.bf16.msra.mxu0 %v270
    %291 = vmatprep.subr.bf16.mxu0 0
    %292 = vmatpush1.bf16.msra.mxu0 %v271
    %293 = vmatprep.subr.bf16.mxu0 0
    %294 = vmatpush1.bf16.msra.mxu0 %v272
    %295 = vmatprep.subr.bf16.mxu0 0
    %296 = vmatpush1.bf16.msra.mxu0 %v273
    %297 = vmatprep.subr.bf16.mxu0 0
    %298 = vmatpush1.bf16.msra.mxu0 %v274
    %299 = vmatprep.subr.bf16.mxu0 0
    %300 = vmatpush1.bf16.msra.mxu0 0
    %301 = vmatprep.subr.bf16.mxu0 0
    %302 = vmatpush1.bf16.msra.mxu0 0
    %303 = vmatprep.subr.bf16.mxu0 0
    %304 = vmatpush1.bf16.msra.mxu0 0
    %305 = vmatprep.subr.bf16.mxu0 0
    %306 = vmatpush1.bf16.msra.mxu0 0
    %307 = vmatprep.subr.bf16.mxu0 0
    %308 = vmatpush1.bf16.msra.mxu0 0
    %309 = vmatprep.subr.bf16.mxu0 0
    %310 = vmatpush1.bf16.msra.mxu0 0
    %311 = vmatprep.subr.bf16.mxu0 0
    %312 = vmatpush1.bf16.msra.mxu0 0
    %313 = vmatprep.subr.bf16.mxu0 0
    %314 = vmatpush1.bf16.msra.mxu0 0
    %315 = vmatprep.mubr.bf16.mxu0 0
    %316 = vmatmul.mubr.bf16.gmra.mrb[0].mxu0 %v113
    %v317 = vpop.f32.mrb[0].mxu0
    %v318 = vadd.f32 %v234, %v317
    %v319 = vpop.f32.mrb[0].mxu0
    %v320 = vpop.f32.mrb[0].mxu0
    %v321 = vadd.f32 %v234, %v320
    %v322 = vpop.f32.mrb[0].mxu0
    %323 = vdwg.mxu0
    %v324 = vadd.f32 %v318, 1.0
    %v325 = vadd.f32 %v321, 1.0
    %v326 = vmul.f32 %v224, %v324
    %v327 = vmul.f32 %v227, %v325
    %328 = vadd.xlane.f32.xlu0 %v326
    %v329 = vpop.xlane.xlu0 %328
    %330 = vadd.xlane.f32.xlu0 %v327
    %v331 = vpop.xlane.xlu0 %330
    %v332 = vmul.f32 %v329, 0.03125
    %v333 = vmul.f32 %v331, 0.03125
    %v334 = vmul.f32 %v326, %v326
    %v335 = vmul.f32 %v327, %v327
    %336 = vadd.xlane.f32.xlu0 %v334
    %v337 = vpop.xlane.xlu0 %336
    %338 = vadd.xlane.f32.xlu0 %v335
    %v339 = vpop.xlane.xlu0 %338
    %v340 = vmul.f32 %v337, 0.03125
    %v341 = vmul.f32 %v339, 0.03125
    %v342 = vmul.f32 %v332, %v332
    %v343 = vmul.f32 %v333, %v333
    %v344 = vsub.f32 %v340, %v342
    %v345 = vsub.f32 %v341, %v343
    %v346 = vmax.f32 %v344, 0.0
    %v347 = vmax.f32 %v345, 0.0
    %v348 = vsub.f32 %v326, %v332
    %v349 = vsub.f32 %v327, %v333
    %v350 = vadd.f32 %v346, 1e-05
    %v351 = vadd.f32 %v347, 1e-05
    %v352 = vrsqrt.pop %v350
    %v353 = vrsqrt.pop %v351
    %v354 = vmul.f32 %v348, %v352
    %v355 = vmul.f32 %v349, %v353
    %v356 = vld [vmem:[%s4 + $0x2] sm:$0x1]
    %v357 = vlaneseq
    %v358 = vshrl.u32 %v357, 7
    %v359 = vsub.s32 0, %v358
    %v360 = vrot.slane %v356, %v359
    %v361 = vmul.f32 %v354, %v360
    %v362 = vmul.f32 %v355, %v360
    %v363 = vld [vmem:[%s4 + $0x3] sm:$0x1]
    %v364 = vlaneseq
    %v365 = vshrl.u32 %v364, 7
    %v366 = vsub.s32 0, %v365
    %v367 = vrot.slane %v363, %v366
    %v368 = vadd.f32 %v361, %v367
    %v369 = vadd.f32 %v362, %v367
    %v370 = vxor.u32 %v368, 2147483648
    %v371 = vxor.u32 %v369, 2147483648
    %v372 = vmul.f32 %v370, 1.442695
    %v373 = vpow.pop %v372
    %v374 = vmul.f32 %v371, 1.442695
    %v375 = vpow.pop %v374
    %v376 = vadd.f32 %v373, 1.0
    %v377 = vadd.f32 %v375, 1.0
    %v378 = vrcp.pop %v376
    %v379 = vmul.f32 1.0, %v378
    %v380 = vrcp.pop %v377
    %v381 = vmul.f32 1.0, %v380
    %v382 = vmul.f32 %v368, %v379
    %v383 = vmul.f32 %v369, %v381
    %384 = vst [vmem:[#allocation10] sm:$0xff] %v382
    %385 = vst [vmem:[#allocation10 + $0x8] sm:$0xff] %v383
    // Predicated region
    $region38: #{tpu_custom_call.1} parent=1 // pred_check
      _
    $region39: #{tpu_custom_call.1} parent=1 // pred_check_branch
      %387 = sbr.rel (0) target = $region41
    $region40: #{tpu_custom_call.1} parent=1 // pred_region
      %s389 = ssub.s32 256, 256
      %390 = vsyncadd [#allocation4], %s389
      %s391 = sshll.u32 [#allocation10], 4
      %s392 = int_to_ptr.vmem [resolvable:$true] %s391
      %397 = dma.vmem_to_hbm [thread:$0]  %s392, 256, %s5, [#allocation4], 128, 128, 8
    $region41: #{tpu_custom_call.1} parent=1 // pred_fallthru
      _
    // Predicated region
    $region42: #{tpu_custom_call.1} parent=1 // pred_check
      _
    $region43: #{tpu_custom_call.1} parent=1 // pred_check_branch
      %399 = sbr.rel (0) target = $region45
    $region44: #{tpu_custom_call.1} parent=1 // pred_region
      %400 = dma.done [#allocation4], 256
    $region45: #{tpu_custom_call.1} parent=1 // pred_fallthru
      _
    %401 = vsyncpa [#allocation3], 1
    %402 = vsyncpa [#allocation6], 1
    %403 = vsyncpa [#allocation9], 1
    %404 = vsyncpa [#allocation4], 1

</llo_original>
